<compile_context>
chip_gen: v7x
topology: tpu7x:2x2x1
jax: 0.10.0
libtpu: 0.0.40
codegen_flags: <defaults>
</compile_context>

<pallas_src>
import functools

import jax
import jax.numpy as jnp
from jax.experimental import pallas as pl
from jax.experimental.pallas import tpu as pltpu


# ---------------------------------------------------------------------------
# graph glue (plain JAX): dense symmetric-normalized adjacency with self loops
# (exactly what GCNConv's gcn_norm computes for unweighted edges)
# ---------------------------------------------------------------------------
def normalized_adjacency(edge_index, num_nodes):
    src, dst = edge_index[0], edge_index[1]
    a = jnp.zeros((num_nodes, num_nodes), jnp.float32)
    a = a.at[dst, src].set(1.0)                         # message flows src -> dst
    a = a + jnp.eye(num_nodes, dtype=jnp.float32)       # add_self_loops=True
    deg = a.sum(axis=1)
    dinv = jax.lax.rsqrt(deg)
    return dinv[:, None] * a * dinv[None, :]            # D^-1/2 (A+I) D^-1/2


# ---------------------------------------------------------------------------
# Fused kernel: 2 GCN layers (adjacency folded into weights) + BN(T) + act.
# One grid step holds the full (B, N, C) extent for its T channels, so the
# per-T-channel training-mode statistics are exact within the block.
# ---------------------------------------------------------------------------
def _gcn_bn_act_kernel(k1_ref, b1_ref, k2_ref, b2_ref, gamma_ref, beta_ref,
                       x_ref, o_ref, *, eps, act):
    nb, t_blk, _ = x_ref.shape            # (B, T_blk, N*V)
    nc = k2_ref.shape[1]                  # N * C
    k1 = k1_ref[...]                      # (N*V, N*C)
    k2 = k2_ref[...]                      # (N*C, N*C)
    b1 = b1_ref[...]                      # (1, N*C)
    b2 = b2_ref[...]                      # (1, N*C)

    # ---- 2 GCN layers: one fat matmul per layer per batch element ----
    h_all = []
    s = jnp.zeros((t_blk, 1), jnp.float32)
    s2 = jnp.zeros((t_blk, 1), jnp.float32)
    for b in range(nb):                                          # B is tiny, static
        h = jnp.dot(x_ref[b], k1, preferred_element_type=jnp.float32) + b1
        h = jnp.dot(h, k2, preferred_element_type=jnp.float32) + b2
        h_all.append(h)                                          # (T_blk, N*C)
        s = s + h.sum(axis=1, keepdims=True)                     # lane reduce
        s2 = s2 + (h * h).sum(axis=1, keepdims=True)

    # ---- BatchNorm2d over T channels (training mode): stats over (B, N, C) ----
    inv_cnt = 1.0 / (nb * nc)
    mean = s * inv_cnt
    var = s2 * inv_cnt - mean * mean                             # biased variance
    inv = jax.lax.rsqrt(var + eps)
    scale = inv * gamma_ref[...]                                 # (T_blk, 1)
    shift = beta_ref[...] - mean * scale                         # (T_blk, 1)

    for b in range(nb):
        y = h_all[b] * scale + shift                             # 2 passes, FMA-able
        if act == "relu":
            y = jnp.maximum(y, 0.0)
        elif act == "sigmoid":
            y = jax.nn.sigmoid(y)
        elif act == "tanh":
            y = jnp.tanh(y)
        elif act == "leaky_relu":
            y = jnp.where(y >= 0.0, y, 0.01 * y)
        elif act == "none":
            pass
        else:
            raise ValueError("Activation function not supported")
        o_ref[b] = y.astype(o_ref.dtype)


# ---------------------------------------------------------------------------
# GCNModule.forward
# ---------------------------------------------------------------------------
def gcn_module_forward(x, edge_index, params, *, activation="none", eps=1e-5,
                       t_split=1):
    if activation not in ("relu", "sigmoid", "tanh", "leaky_relu", "none"):
        raise ValueError("Activation function not supported")

    B, T, N, V = x.shape
    C = params["w1"].shape[1]
    NV, NC = N * V, N * C

    ahat = normalized_adjacency(edge_index, N)                    # (N, N)

    # Fold the shared normalized adjacency into each layer's weight (tiny,
    # parameter-only computation):   A X W + 1 b  ==  x_flat @ kron(A^T, W) + tile(b, N)
    k1 = jnp.kron(ahat.T, params["w1"].astype(jnp.float32))       # (N*V, N*C)
    k2 = jnp.kron(ahat.T, params["w2"].astype(jnp.float32))       # (N*C, N*C)
    b1n = jnp.tile(params["b1"].reshape(1, C).astype(jnp.float32), (1, N))
    b2n = jnp.tile(params["b2"].reshape(1, C).astype(jnp.float32), (1, N))

    # Native layout everywhere; merging/splitting trailing dims of a row-major
    # array is a bitcast reshape (no copy, no extra XLA kernel).
    x2 = x.reshape(B, T, NV).astype(jnp.float32)
    gamma2 = params["gamma"].reshape(T, 1).astype(jnp.float32)
    beta2 = params["beta"].reshape(T, 1).astype(jnp.float32)

    # grid=1 by default (single-TC v5e/v6e; footprint << VMEM). A T-split for
    # dual-TC v7x is only taken when the block keeps the (8,128) layout rule.
    n_tblk = t_split if (t_split > 1 and T % t_split == 0
                         and (T // t_split) % 8 == 0) else 1
    t_blk = T // n_tblk

    kernel = functools.partial(_gcn_bn_act_kernel, eps=eps, act=activation)
    out = pl.pallas_call(
        kernel,
        out_shape=jax.ShapeDtypeStruct((B, T, NC), jnp.float32),
        grid=(n_tblk,),
        in_specs=[
            pl.BlockSpec((NV, NC), lambda t: (0, 0)),             # kron(A^T, W1)
            pl.BlockSpec((1, NC), lambda t: (0, 0)),              # b1 tiled over nodes
            pl.BlockSpec((NC, NC), lambda t: (0, 0)),             # kron(A^T, W2)
            pl.BlockSpec((1, NC), lambda t: (0, 0)),              # b2 tiled over nodes
            pl.BlockSpec((t_blk, 1), lambda t: (t, 0)),           # gamma (per T)
            pl.BlockSpec((t_blk, 1), lambda t: (t, 0)),           # beta  (per T)
            pl.BlockSpec((B, t_blk, NV), lambda t: (0, t, 0)),    # X block
        ],
        out_specs=pl.BlockSpec((B, t_blk, NC), lambda t: (0, t, 0)),
        compiler_params=pltpu.CompilerParams(
            dimension_semantics=("parallel",)),
    )(k1, b1n, k2, b2n, gamma2, beta2, x2)

    return out.reshape(B, T, N, C)                                # bitcast reshape


# ---------------------------------------------------------------------------
# pure-JAX reference (for correctness check only) — layer-by-layer, as in torch
# ---------------------------------------------------------------------------
def reference_forward(x, edge_index, params, activation):
    B, T, N, V = x.shape
    ahat = normalized_adjacency(edge_index, N)
    xf = x.reshape(B * T, N, V)
    h = jnp.einsum("nm,fmc->fnc", ahat, xf @ params["w1"]) + params["b1"]
    h = jnp.einsum("nm,fmc->fnc", ahat, h @ params["w2"]) + params["b2"]
    h = h.reshape(B, T, N, -1)
    mean = h.mean(axis=(0, 2, 3), keepdims=True)
    var = ((h - mean) ** 2).mean(axis=(0, 2, 3), keepdims=True)   # biased
    y = (h - mean) / jnp.sqrt(var + 1e-5)
    y = y * params["gamma"][None, :, None, None] + params["beta"][None, :, None, None]
    if activation == "relu":
        y = jnp.maximum(y, 0.0)
    return y


if __name__ == "__main__":
    key = jax.random.PRNGKey(0)
    # T=100 is forced by the module's hardcoded nn.BatchNorm2d(100)
    B, T, N, V = 2, 100, 8, 4          # in_channels = V = 4
    C_OUT = 8                          # out_channels
    ACT = "relu"                       # choose_activation('relu')

    # undirected chain graph over the N "joints" (both directions)
    src = jnp.arange(N - 1, dtype=jnp.int32)
    dst = jnp.arange(1, N, dtype=jnp.int32)
    edge_index = jnp.stack([jnp.concatenate([src, dst]),
                            jnp.concatenate([dst, src])], axis=0)   # (2, 14)

    def glorot(k, shape):
        a = (6.0 / (shape[0] + shape[1])) ** 0.5
        return jax.random.uniform(k, shape, jnp.float32, -a, a)

    k1, k2, k3, k4, kx = jax.random.split(key, 5)
    params = dict(
        w1=glorot(k1, (V, C_OUT)),
        b1=0.1 * jax.random.normal(k3, (1, C_OUT), jnp.float32),
        w2=glorot(k2, (C_OUT, C_OUT)),
        b2=0.1 * jax.random.normal(k4, (1, C_OUT), jnp.float32),
        gamma=jnp.ones((T,), jnp.float32),      # BatchNorm2d weight init
        beta=jnp.zeros((T,), jnp.float32),      # BatchNorm2d bias init
    )

    x = jax.random.normal(kx, (B, T, N, V), jnp.float32)

    out = gcn_module_forward(x, edge_index, params, activation=ACT)
    out = jax.block_until_ready(out)

    assert out.shape == (B, T, N, C_OUT), out.shape
    ref = reference_forward(x, edge_index, params, ACT)
    max_err = float(jnp.max(jnp.abs(out - ref)))
    assert max_err < 1e-3, f"mismatch vs reference: {max_err}"

    print("KERNEL_OK")
</pallas_src>

<mosaic_0001>
module attributes {stable_mosaic.version = 11 : i64} {
  func.func @_gcn_bn_act_kernel(%arg0: i32, %arg1: memref<32x64xf32, #tpu.memory_space<vmem>>, %arg2: memref<1x64xf32, #tpu.memory_space<vmem>>, %arg3: memref<64x64xf32, #tpu.memory_space<vmem>>, %arg4: memref<1x64xf32, #tpu.memory_space<vmem>>, %arg5: memref<100x1xf32, #tpu.memory_space<vmem>>, %arg6: memref<100x1xf32, #tpu.memory_space<vmem>>, %arg7: memref<2x100x32xf32, #tpu.memory_space<vmem>>, %arg8: memref<2x100x64xf32, #tpu.memory_space<vmem>>) attributes {dimension_semantics = [#tpu.dimension_semantics<parallel>], iteration_bounds = array<i64: 1>, scalar_prefetch = 0 : i64, scratch_operands = 0 : i64, tpu.core_type = #tpu.core_type<tc>, window_params = [{pipeline_mode = #tpu.pipeline_mode<synchronous>, transform_indices = @transform_0, window_bounds = array<i64: 32, 64>}, {pipeline_mode = #tpu.pipeline_mode<synchronous>, transform_indices = @transform_1, window_bounds = array<i64: 1, 64>}, {pipeline_mode = #tpu.pipeline_mode<synchronous>, transform_indices = @transform_2, window_bounds = array<i64: 64, 64>}, {pipeline_mode = #tpu.pipeline_mode<synchronous>, transform_indices = @transform_3, window_bounds = array<i64: 1, 64>}, {transform_indices = @transform_4, window_bounds = array<i64: 100, 1>}, {transform_indices = @transform_5, window_bounds = array<i64: 100, 1>}, {transform_indices = @transform_6, window_bounds = array<i64: 2, 100, 32>}, {transform_indices = @transform_7, window_bounds = array<i64: 2, 100, 64>}]} {
    %c0 = arith.constant 0 : index
    %c0_0 = arith.constant 0 : index
    %0 = vector.load %arg1[%c0, %c0_0] : memref<32x64xf32, #tpu.memory_space<vmem>>, vector<32x64xf32>
    %c0_1 = arith.constant 0 : index
    %c0_2 = arith.constant 0 : index
    %1 = vector.load %arg3[%c0_1, %c0_2] : memref<64x64xf32, #tpu.memory_space<vmem>>, vector<64x64xf32>
    %c0_3 = arith.constant 0 : index
    %c0_4 = arith.constant 0 : index
    %2 = vector.load %arg2[%c0_3, %c0_4] : memref<1x64xf32, #tpu.memory_space<vmem>>, vector<1x64xf32>
    %c0_5 = arith.constant 0 : index
    %c0_6 = arith.constant 0 : index
    %3 = vector.load %arg4[%c0_5, %c0_6] : memref<1x64xf32, #tpu.memory_space<vmem>>, vector<1x64xf32>
    %cst = arith.constant 0.000000e+00 : f32
    %4 = vector.broadcast %cst : f32 to vector<100x1xf32>
    %cst_7 = arith.constant 0.000000e+00 : f32
    %5 = vector.broadcast %cst_7 : f32 to vector<100x1xf32>
    %c0_8 = arith.constant 0 : index
    %c0_9 = arith.constant 0 : index
    %c0_10 = arith.constant 0 : index
    %6 = vector.load %arg7[%c0_8, %c0_9, %c0_10] : memref<2x100x32xf32, #tpu.memory_space<vmem>>, vector<1x100x32xf32>
    %7 = vector.shape_cast %6 : vector<1x100x32xf32> to vector<100x32xf32>
    %cst_11 = arith.constant dense<0.000000e+00> : vector<100x64xf32>
    %8 = tpu.matmul %7, %0, %cst_11 {dimension_numbers = #tpu.dot_dimension_numbers<[1], [0], [0], [1], [0, 0, 1, 1], [], []>} : vector<100x32xf32>, vector<32x64xf32>, vector<100x64xf32> -> vector<100x64xf32>
    %9 = vector.broadcast %2 : vector<1x64xf32> to vector<100x64xf32>
    %10 = arith.addf %8, %9 : vector<100x64xf32>
    %cst_12 = arith.constant dense<0.000000e+00> : vector<100x64xf32>
    %11 = tpu.matmul %10, %1, %cst_12 {dimension_numbers = #tpu.dot_dimension_numbers<[1], [0], [0], [1], [0, 0, 1, 1], [], []>} : vector<100x64xf32>, vector<64x64xf32>, vector<100x64xf32> -> vector<100x64xf32>
    %12 = vector.broadcast %3 : vector<1x64xf32> to vector<100x64xf32>
    %13 = arith.addf %11, %12 : vector<100x64xf32>
    %cst_13 = arith.constant dense<0.000000e+00> : vector<100xf32>
    %14 = vector.multi_reduction <add>, %13, %cst_13 [1] : vector<100x64xf32> to vector<100xf32>
    %15 = vector.shape_cast %14 : vector<100xf32> to vector<100x1xf32>
    %16 = arith.addf %4, %15 : vector<100x1xf32>
    %17 = arith.mulf %13, %13 : vector<100x64xf32>
    %cst_14 = arith.constant dense<0.000000e+00> : vector<100xf32>
    %18 = vector.multi_reduction <add>, %17, %cst_14 [1] : vector<100x64xf32> to vector<100xf32>
    %19 = vector.shape_cast %18 : vector<100xf32> to vector<100x1xf32>
    %20 = arith.addf %5, %19 : vector<100x1xf32>
    %c1 = arith.constant 1 : index
    %c0_15 = arith.constant 0 : index
    %c0_16 = arith.constant 0 : index
    %21 = vector.load %arg7[%c1, %c0_15, %c0_16] : memref<2x100x32xf32, #tpu.memory_space<vmem>>, vector<1x100x32xf32>
    %22 = vector.shape_cast %21 : vector<1x100x32xf32> to vector<100x32xf32>
    %cst_17 = arith.constant dense<0.000000e+00> : vector<100x64xf32>
    %23 = tpu.matmul %22, %0, %cst_17 {dimension_numbers = #tpu.dot_dimension_numbers<[1], [0], [0], [1], [0, 0, 1, 1], [], []>} : vector<100x32xf32>, vector<32x64xf32>, vector<100x64xf32> -> vector<100x64xf32>
    %24 = vector.broadcast %2 : vector<1x64xf32> to vector<100x64xf32>
    %25 = arith.addf %23, %24 : vector<100x64xf32>
    %cst_18 = arith.constant dense<0.000000e+00> : vector<100x64xf32>
    %26 = tpu.matmul %25, %1, %cst_18 {dimension_numbers = #tpu.dot_dimension_numbers<[1], [0], [0], [1], [0, 0, 1, 1], [], []>} : vector<100x64xf32>, vector<64x64xf32>, vector<100x64xf32> -> vector<100x64xf32>
    %27 = vector.broadcast %3 : vector<1x64xf32> to vector<100x64xf32>
    %28 = arith.addf %26, %27 : vector<100x64xf32>
    %cst_19 = arith.constant dense<0.000000e+00> : vector<100xf32>
    %29 = vector.multi_reduction <add>, %28, %cst_19 [1] : vector<100x64xf32> to vector<100xf32>
    %30 = vector.shape_cast %29 : vector<100xf32> to vector<100x1xf32>
    %31 = arith.addf %16, %30 : vector<100x1xf32>
    %32 = arith.mulf %28, %28 : vector<100x64xf32>
    %cst_20 = arith.constant dense<0.000000e+00> : vector<100xf32>
    %33 = vector.multi_reduction <add>, %32, %cst_20 [1] : vector<100x64xf32> to vector<100xf32>
    %34 = vector.shape_cast %33 : vector<100xf32> to vector<100x1xf32>
    %35 = arith.addf %20, %34 : vector<100x1xf32>
    %cst_21 = arith.constant 7.812500e-03 : f32
    %36 = vector.broadcast %cst_21 : f32 to vector<100x1xf32>
    %37 = arith.mulf %31, %36 : vector<100x1xf32>
    %cst_22 = arith.constant 7.812500e-03 : f32
    %38 = vector.broadcast %cst_22 : f32 to vector<100x1xf32>
    %39 = arith.mulf %35, %38 : vector<100x1xf32>
    %40 = arith.mulf %37, %37 : vector<100x1xf32>
    %41 = arith.subf %39, %40 : vector<100x1xf32>
    %cst_23 = arith.constant 9.99999974E-6 : f32
    %42 = vector.broadcast %cst_23 : f32 to vector<100x1xf32>
    %43 = arith.addf %41, %42 : vector<100x1xf32>
    %44 = math.rsqrt %43 : vector<100x1xf32>
    %c0_24 = arith.constant 0 : index
    %c0_25 = arith.constant 0 : index
    %45 = vector.load %arg5[%c0_24, %c0_25] : memref<100x1xf32, #tpu.memory_space<vmem>>, vector<100x1xf32>
    %46 = arith.mulf %44, %45 : vector<100x1xf32>
    %c0_26 = arith.constant 0 : index
    %c0_27 = arith.constant 0 : index
    %47 = vector.load %arg6[%c0_26, %c0_27] : memref<100x1xf32, #tpu.memory_space<vmem>>, vector<100x1xf32>
    %48 = arith.mulf %37, %46 : vector<100x1xf32>
    %49 = arith.subf %47, %48 : vector<100x1xf32>
    %50 = vector.broadcast %46 : vector<100x1xf32> to vector<100x64xf32>
    %51 = arith.mulf %13, %50 : vector<100x64xf32>
    %52 = vector.broadcast %49 : vector<100x1xf32> to vector<100x64xf32>
    %53 = arith.addf %51, %52 : vector<100x64xf32>
    %cst_28 = arith.constant 0.000000e+00 : f32
    %54 = vector.broadcast %cst_28 : f32 to vector<100x64xf32>
    %55 = arith.maximumf %53, %54 : vector<100x64xf32>
    %c0_29 = arith.constant 0 : index
    %c0_30 = arith.constant 0 : index
    %c0_31 = arith.constant 0 : index
    %56 = vector.load %arg8[%c0_29, %c0_30, %c0_31] : memref<2x100x64xf32, #tpu.memory_space<vmem>>, vector<1x100x64xf32>
    %57 = vector.shape_cast %56 : vector<1x100x64xf32> to vector<100x64xf32>
    %58 = vector.shape_cast %55 : vector<100x64xf32> to vector<1x100x64xf32>
    tpu.vector_store %arg8[%c0_29, %c0_30, %c0_31], %58 {strides = array<i32>} : memref<2x100x64xf32, #tpu.memory_space<vmem>>, vector<1x100x64xf32>,
    %59 = vector.broadcast %46 : vector<100x1xf32> to vector<100x64xf32>
    %60 = arith.mulf %28, %59 : vector<100x64xf32>
    %61 = vector.broadcast %49 : vector<100x1xf32> to vector<100x64xf32>
    %62 = arith.addf %60, %61 : vector<100x64xf32>
    %cst_32 = arith.constant 0.000000e+00 : f32
    %63 = vector.broadcast %cst_32 : f32 to vector<100x64xf32>
    %64 = arith.maximumf %62, %63 : vector<100x64xf32>
    %c1_33 = arith.constant 1 : index
    %c0_34 = arith.constant 0 : index
    %c0_35 = arith.constant 0 : index
    %65 = vector.load %arg8[%c1_33, %c0_34, %c0_35] : memref<2x100x64xf32, #tpu.memory_space<vmem>>, vector<1x100x64xf32>
    %66 = vector.shape_cast %65 : vector<1x100x64xf32> to vector<100x64xf32>
    %67 = vector.shape_cast %64 : vector<100x64xf32> to vector<1x100x64xf32>
    tpu.vector_store %arg8[%c1_33, %c0_34, %c0_35], %67 {strides = array<i32>} : memref<2x100x64xf32, #tpu.memory_space<vmem>>, vector<1x100x64xf32>,
    return
  }
  func.func @transform_0(%arg0: i32) -> (i32, i32) {
    %c0_i32 = arith.constant 0 : i32
    %c0_i32_0 = arith.constant 0 : i32
    %c0_i32_1 = arith.constant 0 : i32
    return %c0_i32, %c0_i32_0 : i32, i32
  }
  func.func @transform_1(%arg0: i32) -> (i32, i32) {
    %c0_i32 = arith.constant 0 : i32
    %c0_i32_0 = arith.constant 0 : i32
    %c0_i32_1 = arith.constant 0 : i32
    return %c0_i32, %c0_i32_0 : i32, i32
  }
  func.func @transform_2(%arg0: i32) -> (i32, i32) {
    %c0_i32 = arith.constant 0 : i32
    %c0_i32_0 = arith.constant 0 : i32
    %c0_i32_1 = arith.constant 0 : i32
    return %c0_i32, %c0_i32_0 : i32, i32
  }
  func.func @transform_3(%arg0: i32) -> (i32, i32) {
    %c0_i32 = arith.constant 0 : i32
    %c0_i32_0 = arith.constant 0 : i32
    %c0_i32_1 = arith.constant 0 : i32
    return %c0_i32, %c0_i32_0 : i32, i32
  }
  func.func @transform_4(%arg0: i32) -> (i32, i32) {
    %c0_i32 = arith.constant 0 : i32
    %c0_i32_0 = arith.constant 0 : i32
    return %arg0, %c0_i32 : i32, i32
  }
  func.func @transform_5(%arg0: i32) -> (i32, i32) {
    %c0_i32 = arith.constant 0 : i32
    %c0_i32_0 = arith.constant 0 : i32
    return %arg0, %c0_i32 : i32, i32
  }
  func.func @transform_6(%arg0: i32) -> (i32, i32, i32) {
    %c0_i32 = arith.constant 0 : i32
    %c0_i32_0 = arith.constant 0 : i32
    %c0_i32_1 = arith.constant 0 : i32
    return %c0_i32, %arg0, %c0_i32_0 : i32, i32, i32
  }
  func.func @transform_7(%arg0: i32) -> (i32, i32, i32) {
    %c0_i32 = arith.constant 0 : i32
    %c0_i32_0 = arith.constant 0 : i32
    %c0_i32_1 = arith.constant 0 : i32
    return %c0_i32, %arg0, %c0_i32_0 : i32, i32, i32
  }
}

</mosaic_0001>

<llo_original>
// kernel: tpu_custom_call.1
$region0: #{tpu_custom_call.1}
  #allocation0 [shape = 'u32[]', space=smem, size = 0x4, offset = 0x4, fixed_abs, tag = 'smem constant byte address 0x4 - core index']
  #allocation1 [shape = 'u32[144,128]{1,0:T(1,128)}', space=vmem, size = 0x12000, scoped, tag = 'internal scratch']
  %s0 = inlined_call_operand.vmem [shape: f32[32,64], index: 0, kind: input, shape index: {}]
  %s1 = inlined_call_operand.vmem [shape: f32[1,64], index: 1, kind: input, shape index: {}]
  %s2 = inlined_call_operand.vmem [shape: f32[64,64], index: 2, kind: input, shape index: {}]
  %s3 = inlined_call_operand.vmem [shape: f32[1,64], index: 3, kind: input, shape index: {}]
  %s4 = inlined_call_operand.vmem [shape: f32[100,1], index: 4, kind: input, shape index: {}]
  %s5 = inlined_call_operand.vmem [shape: f32[100,1], index: 5, kind: input, shape index: {}]
  %s6 = inlined_call_operand.vmem [shape: f32[2,100,32], index: 6, kind: input, shape index: {}]
  %s7 = inlined_call_operand.vmem [shape: f32[2,100,64], index: 7, kind: output, shape index: {}]
  %s8 = sld [smem:[#allocation0]]
  $region38: #{tpu_custom_call.1} parent=0
    _
  %s10 = ssub.s32 1, %s8
  %s11 = scalar_select 0, %s10, %s8
  // Predicated region
  $region2: #{tpu_custom_call.1} parent=0 // pred_check
    _
  $region3: #{tpu_custom_call.1} parent=0 // pred_check_branch
    %13 = sbr.rel (0) target = $region5
  $region4: #{tpu_custom_call.1} parent=0 // pred_region
    _
  $region5: #{tpu_custom_call.1} parent=0 // pred_fallthru
    _
  // Predicated region
  $region6: #{tpu_custom_call.1} parent=0 // pred_check
    _
  $region7: #{tpu_custom_call.1} parent=0 // pred_check_branch
    %15 = sbr.rel (0) target = $region9
  $region8: #{tpu_custom_call.1} parent=0 // pred_region
    _
  $region9: #{tpu_custom_call.1} parent=0 // pred_fallthru
    _
  // Predicated region
  $region10: #{tpu_custom_call.1} parent=0 // pred_check
    _
  $region11: #{tpu_custom_call.1} parent=0 // pred_check_branch
    %17 = sbr.rel (0) target = $region13
  $region12: #{tpu_custom_call.1} parent=0 // pred_region
    _
  $region13: #{tpu_custom_call.1} parent=0 // pred_fallthru
    _
  // Predicated region
  $region14: #{tpu_custom_call.1} parent=0 // pred_check
    _
  $region15: #{tpu_custom_call.1} parent=0 // pred_check_branch
    %19 = sbr.rel (0) target = $region17
  $region16: #{tpu_custom_call.1} parent=0 // pred_region
    _
  $region17: #{tpu_custom_call.1} parent=0 // pred_fallthru
    _
  // Predicated region
  $region18: #{tpu_custom_call.1} parent=0 // pred_check
    _
  $region19: #{tpu_custom_call.1} parent=0 // pred_check_branch
    %21 = sbr.rel (0) target = $region21
  $region20: #{tpu_custom_call.1} parent=0 // pred_region
    _
  $region21: #{tpu_custom_call.1} parent=0 // pred_fallthru
    _
  // Predicated region
  $region22: #{tpu_custom_call.1} parent=0 // pred_check
    _
  $region23: #{tpu_custom_call.1} parent=0 // pred_check_branch
    %23 = sbr.rel (0) target = $region25
  $region24: #{tpu_custom_call.1} parent=0 // pred_region
    _
  $region25: #{tpu_custom_call.1} parent=0 // pred_fallthru
    _
  // Predicated region
  $region26: #{tpu_custom_call.1} parent=0 // pred_check
    _
  $region27: #{tpu_custom_call.1} parent=0 // pred_check_branch
    %25 = sbr.rel (0) target = $region29
  $region28: #{tpu_custom_call.1} parent=0 // pred_region
    _
  $region29: #{tpu_custom_call.1} parent=0 // pred_fallthru
    _
  %v26 = vld [vmem:[%s0] sm:$0xff]
  %v27 = vld [vmem:[%s0 + $0x8] sm:$0xff]
  %v28 = vld [vmem:[%s0 + $0x10] sm:$0xff]
  %v29 = vld [vmem:[%s0 + $0x18] sm:$0xff]
  %v30 = vld [vmem:[%s2] sm:$0xff]
  %v31 = vld [vmem:[%s2 + $0x8] sm:$0xff]
  %v32 = vld [vmem:[%s2 + $0x10] sm:$0xff]
  %v33 = vld [vmem:[%s2 + $0x18] sm:$0xff]
  %v34 = vld [vmem:[%s2 + $0x20] sm:$0xff]
  %v35 = vld [vmem:[%s2 + $0x28] sm:$0xff]
  %v36 = vld [vmem:[%s2 + $0x30] sm:$0xff]
  %v37 = vld [vmem:[%s2 + $0x38] sm:$0xff]
  %v38 = vld [vmem:[%s1] sm:$0x1]
  %v39 = vld [vmem:[%s3] sm:$0x1]
  %v40 = vld [vmem:[%s6] sm:$0xff]
  %v41 = vld [vmem:[%s6 + $0x8] sm:$0xff]
  %v42 = vld [vmem:[%s6 + $0x10] sm:$0xff]
  %v43 = vld [vmem:[%s6 + $0x18] sm:$0xff]
  %v44 = vld [vmem:[%s6 + $0x20] sm:$0xff]
  %v45 = vld [vmem:[%s6 + $0x28] sm:$0xff]
  %v46 = vld [vmem:[%s6 + $0x30] sm:$0xff]
  %v47 = vld [vmem:[%s6 + $0x38] sm:$0xff]
  %v48 = vld [vmem:[%s6 + $0x40] sm:$0xff]
  %v49 = vld [vmem:[%s6 + $0x48] sm:$0xff]
  %v50 = vld [vmem:[%s6 + $0x50] sm:$0xff]
  %v51 = vld [vmem:[%s6 + $0x58] sm:$0xff]
  %v52 = vld [vmem:[%s6 + $0x60] sm:$0xf]
  %v54 = vlaneseq
  %v55 = vshrl.u32 %v54, 7
  %v56 = vsub.s32 0, %v55
  %v57 = vrot.slane %v38, %v56
  %vm59 = vcmask 261120
  %v61 = vsel %vm59, %v40, 0
  %v64 = vsel %vm59, %v41, 0
  %v67 = vsel %vm59, %v42, 0
  %v70 = vsel %vm59, %v43, 0
  %v73 = vsel %vm59, %v44, 0
  %v76 = vsel %vm59, %v45, 0
  %v79 = vsel %vm59, %v46, 0
  %v82 = vsel %vm59, %v47, 0
  %v85 = vsel %vm59, %v48, 0
  %v88 = vsel %vm59, %v49, 0
  %v91 = vsel %vm59, %v50, 0
  %v94 = vsel %vm59, %v51, 0
  %v97 = vsel %vm59, %v52, 0
  %99 = vmatprep.subr.mxu0 0.0
  %100 = vmatpush1.msra.mxu0 %v26
  %101 = vmatprep.subr.mxu0 0.0
  %102 = vmatpush1.msra.mxu0 %v27
  %103 = vmatprep.subr.mxu0 0.0
  %104 = vmatpush1.msra.mxu0 %v28
  %105 = vmatprep.subr.mxu0 0.0
  %106 = vmatpush1.msra.mxu0 %v29
  %107 = vmatprep.subr.mxu0 0.0
  %108 = vmatpush1.msra.mxu0 0.0
  %109 = vmatprep.subr.mxu0 0.0
  %110 = vmatpush1.msra.mxu0 0.0
  %111 = vmatprep.subr.mxu0 0.0
  %112 = vmatpush1.msra.mxu0 0.0
  %113 = vmatprep.subr.mxu0 0.0
  %114 = vmatpush1.msra.mxu0 0.0
  %115 = vmatprep.subr.mxu0 0.0
  %116 = vmatpush1.msra.mxu0 0.0
  %117 = vmatprep.subr.mxu0 0.0
  %118 = vmatpush1.msra.mxu0 0.0
  %119 = vmatprep.subr.mxu0 0.0
  %120 = vmatpush1.msra.mxu0 0.0
  %121 = vmatprep.subr.mxu0 0.0
  %122 = vmatpush1.msra.mxu0 0.0
  %123 = vmatprep.subr.mxu0 0.0
  %124 = vmatpush1.msra.mxu0 0.0
  %125 = vmatprep.subr.mxu0 0.0
  %126 = vmatpush1.msra.mxu0 0.0
  %127 = vmatprep.subr.mxu0 0.0
  %128 = vmatpush1.msra.mxu0 0.0
  %129 = vmatprep.subr.mxu0 0.0
  %130 = vmatpush1.msra.mxu0 0.0
  %131 = vmatprep.subr.mxu0 0.0
  %132 = vmatpush1.msra.mxu0 0.0
  %133 = vmatprep.subr.mxu0 0.0
  %134 = vmatpush1.msra.mxu0 0.0
  %135 = vmatprep.subr.mxu0 0.0
  %136 = vmatpush1.msra.mxu0 0.0
  %137 = vmatprep.subr.mxu0 0.0
  %138 = vmatpush1.msra.mxu0 0.0
  %139 = vmatprep.subr.mxu0 0.0
  %140 = vmatpush1.msra.mxu0 0.0
  %141 = vmatprep.subr.mxu0 0.0
  %142 = vmatpush1.msra.mxu0 0.0
  %143 = vmatprep.subr.mxu0 0.0
  %144 = vmatpush1.msra.mxu0 0.0
  %145 = vmatprep.subr.mxu0 0.0
  %146 = vmatpush1.msra.mxu0 0.0
  %147 = vmatprep.subr.mxu0 0.0
  %148 = vmatpush1.msra.mxu0 0.0
  %149 = vmatprep.subr.mxu0 0.0
  %150 = vmatpush1.msra.mxu0 0.0
  %151 = vmatprep.subr.mxu0 0.0
  %152 = vmatpush1.msra.mxu0 0.0
  %153 = vmatprep.subr.mxu0 0.0
  %154 = vmatpush1.msra.mxu0 0.0
  %155 = vmatprep.subr.mxu0 0.0
  %156 = vmatpush1.msra.mxu0 0.0
  %157 = vmatprep.subr.mxu0 0.0
  %158 = vmatpush1.msra.mxu0 0.0
  %159 = vmatprep.subr.mxu0 0.0
  %160 = vmatpush1.msra.mxu0 0.0
  %161 = vmatprep.subr.mxu0 0.0
  %162 = vmatpush1.msra.mxu0 0.0
  %163 = vmatprep.mubr.f32.mxu0 0.0
  %164 = vmatmul.mubr.f32.gmra.mrb[0].mxu0 %v61
  %v165 = vpop.f32.mrb[0].mxu0
  %v166 = vadd.f32 %v57, %v165
  %v167 = vpop.f32.mrb[0].mxu0
  %168 = vmatprep.mubr.f32.mxu0 0.0
  %169 = vmatmul.mubr.f32.gmra.mrb[0].mxu0 %v64
  %v170 = vpop.f32.mrb[0].mxu0
  %v171 = vadd.f32 %v57, %v170
  %v172 = vpop.f32.mrb[0].mxu0
  %173 = vmatprep.mubr.f32.mxu0 0.0
  %174 = vmatmul.mubr.f32.gmra.mrb[0].mxu0 %v67
  %v175 = vpop.f32.mrb[0].mxu0
  %v176 = vadd.f32 %v57, %v175
  %v177 = vpop.f32.mrb[0].mxu0
  %178 = vmatprep.mubr.f32.mxu0 0.0
  %179 = vmatmul.mubr.f32.gmra.mrb[0].mxu0 %v70
  %v180 = vpop.f32.mrb[0].mxu0
  %v181 = vadd.f32 %v57, %v180
  %v182 = vpop.f32.mrb[0].mxu0
  %183 = vmatprep.mubr.f32.mxu0 0.0
  %184 = vmatmul.mubr.f32.gmra.mrb[0].mxu0 %v73
  %v185 = vpop.f32.mrb[0].mxu0
  %v186 = vadd.f32 %v57, %v185
  %v187 = vpop.f32.mrb[0].mxu0
  %188 = vmatprep.mubr.f32.mxu0 0.0
  %189 = vmatmul.mubr.f32.gmra.mrb[0].mxu0 %v76
  %v190 = vpop.f32.mrb[0].mxu0
  %v191 = vadd.f32 %v57, %v190
  %v192 = vpop.f32.mrb[0].mxu0
  %193 = vmatprep.mubr.f32.mxu0 0.0
  %194 = vmatmul.mubr.f32.gmra.mrb[0].mxu0 %v79
  %v195 = vpop.f32.mrb[0].mxu0
  %v196 = vadd.f32 %v57, %v195
  %v197 = vpop.f32.mrb[0].mxu0
  %198 = vmatprep.mubr.f32.mxu0 0.0
  %199 = vmatmul.mubr.f32.gmra.mrb[0].mxu0 %v82
  %v200 = vpop.f32.mrb[0].mxu0
  %v201 = vadd.f32 %v57, %v200
  %v202 = vpop.f32.mrb[0].mxu0
  %203 = vmatprep.mubr.f32.mxu0 0.0
  %204 = vmatmul.mubr.f32.gmra.mrb[0].mxu0 %v85
  %v205 = vpop.f32.mrb[0].mxu0
  %v206 = vadd.f32 %v57, %v205
  %v207 = vpop.f32.mrb[0].mxu0
  %208 = vmatprep.mubr.f32.mxu0 0.0
  %209 = vmatmul.mubr.f32.gmra.mrb[0].mxu0 %v88
  %v210 = vpop.f32.mrb[0].mxu0
  %v211 = vadd.f32 %v57, %v210
  %v212 = vpop.f32.mrb[0].mxu0
  %213 = vmatprep.mubr.f32.mxu0 0.0
  %214 = vmatmul.mubr.f32.gmra.mrb[0].mxu0 %v91
  %v215 = vpop.f32.mrb[0].mxu0
  %v216 = vadd.f32 %v57, %v215
  %v217 = vpop.f32.mrb[0].mxu0
  %218 = vmatprep.mubr.f32.mxu0 0.0
  %219 = vmatmul.mubr.f32.gmra.mrb[0].mxu0 %v94
  %v220 = vpop.f32.mrb[0].mxu0
  %v221 = vadd.f32 %v57, %v220
  %v222 = vpop.f32.mrb[0].mxu0
  %223 = vmatprep.mubr.f32.mxu0 0.0
  %224 = vmatmul.mubr.f32.gmra.mrb[0].mxu0 %v97
  %v225 = vpop.f32.mrb[0].mxu0
  %v226 = vadd.f32 %v57, %v225
  %v227 = vpop.f32.mrb[0].mxu0
  %228 = vdwg.mxu0
  %v230 = vlaneseq
  %v231 = vshrl.u32 %v230, 7
  %v232 = vsub.s32 0, %v231
  %v233 = vrot.slane %v39, %v232
  %vm235 = vcmask 523264
  %v237 = vsel %vm235, %v166, 0
  %v240 = vsel %vm235, %v171, 0
  %v243 = vsel %vm235, %v176, 0
  %v246 = vsel %vm235, %v181, 0
  %v249 = vsel %vm235, %v186, 0
  %v252 = vsel %vm235, %v191, 0
  %v255 = vsel %vm235, %v196, 0
  %v258 = vsel %vm235, %v201, 0
  %v261 = vsel %vm235, %v206, 0
  %v264 = vsel %vm235, %v211, 0
  %v267 = vsel %vm235, %v216, 0
  %v270 = vsel %vm235, %v221, 0
  %v273 = vsel %vm235, %v226, 0
  %275 = vmatprep.subr.mxu0 0.0
  %276 = vmatpush1.msra.mxu0 %v30
  %277 = vmatprep.subr.mxu0 0.0
  %278 = vmatpush1.msra.mxu0 %v31
  %279 = vmatprep.subr.mxu0 0.0
  %280 = vmatpush1.msra.mxu0 %v32
  %281 = vmatprep.subr.mxu0 0.0
  %282 = vmatpush1.msra.mxu0 %v33
  %283 = vmatprep.subr.mxu0 0.0
  %284 = vmatpush1.msra.mxu0 %v34
  %285 = vmatprep.subr.mxu0 0.0
  %286 = vmatpush1.msra.mxu0 %v35
  %287 = vmatprep.subr.mxu0 0.0
  %288 = vmatpush1.msra.mxu0 %v36
  %289 = vmatprep.subr.mxu0 0.0
  %290 = vmatpush1.msra.mxu0 %v37
  %291 = vmatprep.subr.mxu0 0.0
  %292 = vmatpush1.msra.mxu0 0.0
  %293 = vmatprep.subr.mxu0 0.0
  %294 = vmatpush1.msra.mxu0 0.0
  %295 = vmatprep.subr.mxu0 0.0
  %296 = vmatpush1.msra.mxu0 0.0
  %297 = vmatprep.subr.mxu0 0.0
  %298 = vmatpush1.msra.mxu0 0.0
  %299 = vmatprep.subr.mxu0 0.0
  %300 = vmatpush1.msra.mxu0 0.0
  %301 = vmatprep.subr.mxu0 0.0
  %302 = vmatpush1.msra.mxu0 0.0
  %303 = vmatprep.subr.mxu0 0.0
  %304 = vmatpush1.msra.mxu0 0.0
  %305 = vmatprep.subr.mxu0 0.0
  %306 = vmatpush1.msra.mxu0 0.0
  %307 = vmatprep.subr.mxu0 0.0
  %308 = vmatpush1.msra.mxu0 0.0
  %309 = vmatprep.subr.mxu0 0.0
  %310 = vmatpush1.msra.mxu0 0.0
  %311 = vmatprep.subr.mxu0 0.0
  %312 = vmatpush1.msra.mxu0 0.0
  %313 = vmatprep.subr.mxu0 0.0
  %314 = vmatpush1.msra.mxu0 0.0
  %315 = vmatprep.subr.mxu0 0.0
  %316 = vmatpush1.msra.mxu0 0.0
  %317 = vmatprep.subr.mxu0 0.0
  %318 = vmatpush1.msra.mxu0 0.0
  %319 = vmatprep.subr.mxu0 0.0
  %320 = vmatpush1.msra.mxu0 0.0
  %321 = vmatprep.subr.mxu0 0.0
  %322 = vmatpush1.msra.mxu0 0.0
  %323 = vmatprep.subr.mxu0 0.0
  %324 = vmatpush1.msra.mxu0 0.0
  %325 = vmatprep.subr.mxu0 0.0
  %326 = vmatpush1.msra.mxu0 0.0
  %327 = vmatprep.subr.mxu0 0.0
  %328 = vmatpush1.msra.mxu0 0.0
  %329 = vmatprep.subr.mxu0 0.0
  %330 = vmatpush1.msra.mxu0 0.0
  %331 = vmatprep.subr.mxu0 0.0
  %332 = vmatpush1.msra.mxu0 0.0
  %333 = vmatprep.subr.mxu0 0.0
  %334 = vmatpush1.msra.mxu0 0.0
  %335 = vmatprep.subr.mxu0 0.0
  %336 = vmatpush1.msra.mxu0 0.0
  %337 = vmatprep.subr.mxu0 0.0
  %338 = vmatpush1.msra.mxu0 0.0
  %339 = vmatprep.mubr.f32.mxu0 0.0
  %340 = vmatmul.mubr.f32.gmra.mrb[0].mxu0 %v237
  %v341 = vpop.f32.mrb[0].mxu0
  %v342 = vadd.f32 %v233, %v341
  %v343 = vpop.f32.mrb[0].mxu0
  %344 = vmatprep.mubr.f32.mxu0 0.0
  %345 = vmatmul.mubr.f32.gmra.mrb[0].mxu0 %v240
  %v346 = vpop.f32.mrb[0].mxu0
  %v347 = vadd.f32 %v233, %v346
  %v348 = vpop.f32.mrb[0].mxu0
  %349 = vmatprep.mubr.f32.mxu0 0.0
  %350 = vmatmul.mubr.f32.gmra.mrb[0].mxu0 %v243
  %v351 = vpop.f32.mrb[0].mxu0
  %v352 = vadd.f32 %v233, %v351
  %v353 = vpop.f32.mrb[0].mxu0
  %354 = vmatprep.mubr.f32.mxu0 0.0
  %355 = vmatmul.mubr.f32.gmra.mrb[0].mxu0 %v246
  %v356 = vpop.f32.mrb[0].mxu0
  %v357 = vadd.f32 %v233, %v356
  %v358 = vpop.f32.mrb[0].mxu0
  %359 = vmatprep.mubr.f32.mxu0 0.0
  %360 = vmatmul.mubr.f32.gmra.mrb[0].mxu0 %v249
  %v361 = vpop.f32.mrb[0].mxu0
  %v362 = vadd.f32 %v233, %v361
  %v363 = vpop.f32.mrb[0].mxu0
  %364 = vmatprep.mubr.f32.mxu0 0.0
  %365 = vmatmul.mubr.f32.gmra.mrb[0].mxu0 %v252
  %v366 = vpop.f32.mrb[0].mxu0
  %v367 = vadd.f32 %v233, %v366
  %v368 = vpop.f32.mrb[0].mxu0
  %369 = vmatprep.mubr.f32.mxu0 0.0
  %370 = vmatmul.mubr.f32.gmra.mrb[0].mxu0 %v255
  %v371 = vpop.f32.mrb[0].mxu0
  %v372 = vadd.f32 %v233, %v371
  %v373 = vpop.f32.mrb[0].mxu0
  %374 = vmatprep.mubr.f32.mxu0 0.0
  %375 = vmatmul.mubr.f32.gmra.mrb[0].mxu0 %v258
  %v376 = vpop.f32.mrb[0].mxu0
  %v377 = vadd.f32 %v233, %v376
  %v378 = vpop.f32.mrb[0].mxu0
  %379 = vmatprep.mubr.f32.mxu0 0.0
  %380 = vmatmul.mubr.f32.gmra.mrb[0].mxu0 %v261
  %v381 = vpop.f32.mrb[0].mxu0
  %v382 = vadd.f32 %v233, %v381
  %v383 = vpop.f32.mrb[0].mxu0
  %384 = vmatprep.mubr.f32.mxu0 0.0
  %385 = vmatmul.mubr.f32.gmra.mrb[0].mxu0 %v264
  %v386 = vpop.f32.mrb[0].mxu0
  %v387 = vadd.f32 %v233, %v386
  %v388 = vpop.f32.mrb[0].mxu0
  %389 = vmatprep.mubr.f32.mxu0 0.0
  %390 = vmatmul.mubr.f32.gmra.mrb[0].mxu0 %v267
  %v391 = vpop.f32.mrb[0].mxu0
  %v392 = vadd.f32 %v233, %v391
  %v393 = vpop.f32.mrb[0].mxu0
  %394 = vmatprep.mubr.f32.mxu0 0.0
  %395 = vmatmul.mubr.f32.gmra.mrb[0].mxu0 %v270
  %v396 = vpop.f32.mrb[0].mxu0
  %v397 = vadd.f32 %v233, %v396
  %v398 = vpop.f32.mrb[0].mxu0
  %399 = vmatprep.mubr.f32.mxu0 0.0
  %400 = vmatmul.mubr.f32.gmra.mrb[0].mxu0 %v273
  %v401 = vpop.f32.mrb[0].mxu0
  %v402 = vadd.f32 %v233, %v401
  %v403 = vpop.f32.mrb[0].mxu0
  %404 = vdwg.mxu0
  %v405 = vsel %vm235, %v342, 0.0
  %406 = vadd.xlane.f32.xlu0 %v405
  %v407 = vpop.xlane.xlu0 %406
  %v408 = vsel %vm235, %v347, 0.0
  %409 = vadd.xlane.f32.xlu0 %v408
  %v410 = vpop.xlane.xlu0 %409
  %v411 = vsel %vm235, %v352, 0.0
  %412 = vadd.xlane.f32.xlu0 %v411
  %v413 = vpop.xlane.xlu0 %412
  %v414 = vsel %vm235, %v357, 0.0
  %415 = vadd.xlane.f32.xlu0 %v414
  %v416 = vpop.xlane.xlu0 %415
  %v417 = vsel %vm235, %v362, 0.0
  %418 = vadd.xlane.f32.xlu0 %v417
  %v419 = vpop.xlane.xlu0 %418
  %v420 = vsel %vm235, %v367, 0.0
  %421 = vadd.xlane.f32.xlu0 %v420
  %v422 = vpop.xlane.xlu0 %421
  %v423 = vsel %vm235, %v372, 0.0
  %424 = vadd.xlane.f32.xlu0 %v423
  %v425 = vpop.xlane.xlu0 %424
  %v426 = vsel %vm235, %v377, 0.0
  %427 = vadd.xlane.f32.xlu0 %v426
  %v428 = vpop.xlane.xlu0 %427
  %v429 = vsel %vm235, %v382, 0.0
  %430 = vadd.xlane.f32.xlu0 %v429
  %v431 = vpop.xlane.xlu0 %430
  %v432 = vsel %vm235, %v387, 0.0
  %433 = vadd.xlane.f32.xlu0 %v432
  %v434 = vpop.xlane.xlu0 %433
  %v435 = vsel %vm235, %v392, 0.0
  %436 = vadd.xlane.f32.xlu0 %v435
  %v437 = vpop.xlane.xlu0 %436
  %v438 = vsel %vm235, %v397, 0.0
  %439 = vadd.xlane.f32.xlu0 %v438
  %v440 = vpop.xlane.xlu0 %439
  %vm441 = vcmask 519168
  %v442 = vsel %vm441, %v402, 0.0
  %443 = vadd.xlane.f32.xlu0 %v442
  %v444 = vpop.xlane.xlu0 %443
  %v445 = vadd.f32 %v407, 0.0
  %v446 = vadd.f32 %v410, 0.0
  %v447 = vadd.f32 %v413, 0.0
  %v448 = vadd.f32 %v416, 0.0
  %v449 = vadd.f32 %v419, 0.0
  %v450 = vadd.f32 %v422, 0.0
  %v451 = vadd.f32 %v425, 0.0
  %v452 = vadd.f32 %v428, 0.0
  %v453 = vadd.f32 %v431, 0.0
  %v454 = vadd.f32 %v434, 0.0
  %v455 = vadd.f32 %v437, 0.0
  %v456 = vadd.f32 %v440, 0.0
  %v457 = vadd.f32 %v444, 0.0
  %v458 = vmul.f32 %v342, %v342
  %v459 = vmul.f32 %v347, %v347
  %v460 = vmul.f32 %v352, %v352
  %v461 = vmul.f32 %v357, %v357
  %v462 = vmul.f32 %v362, %v362
  %v463 = vmul.f32 %v367, %v367
  %v464 = vmul.f32 %v372, %v372
  %v465 = vmul.f32 %v377, %v377
  %v466 = vmul.f32 %v382, %v382
  %v467 = vmul.f32 %v387, %v387
  %v468 = vmul.f32 %v392, %v392
  %v469 = vmul.f32 %v397, %v397
  %v470 = vmul.f32 %v402, %v402
  %v471 = vsel %vm235, %v458, 0.0
  %472 = vadd.xlane.f32.xlu0 %v471
  %v473 = vpop.xlane.xlu0 %472
  %v474 = vsel %vm235, %v459, 0.0
  %475 = vadd.xlane.f32.xlu0 %v474
  %v476 = vpop.xlane.xlu0 %475
  %v477 = vsel %vm235, %v460, 0.0
  %478 = vadd.xlane.f32.xlu0 %v477
  %v479 = vpop.xlane.xlu0 %478
  %v480 = vsel %vm235, %v461, 0.0
  %481 = vadd.xlane.f32.xlu0 %v480
  %v482 = vpop.xlane.xlu0 %481
  %v483 = vsel %vm235, %v462, 0.0
  %484 = vadd.xlane.f32.xlu0 %v483
  %v485 = vpop.xlane.xlu0 %484
  %v486 = vsel %vm235, %v463, 0.0
  %487 = vadd.xlane.f32.xlu0 %v486
  %v488 = vpop.xlane.xlu0 %487
  %v489 = vsel %vm235, %v464, 0.0
  %490 = vadd.xlane.f32.xlu0 %v489
  %v491 = vpop.xlane.xlu0 %490
  %v492 = vsel %vm235, %v465, 0.0
  %493 = vadd.xlane.f32.xlu0 %v492
  %v494 = vpop.xlane.xlu0 %493
  %v495 = vsel %vm235, %v466, 0.0
  %496 = vadd.xlane.f32.xlu0 %v495
  %v497 = vpop.xlane.xlu0 %496
  %v498 = vsel %vm235, %v467, 0.0
  %499 = vadd.xlane.f32.xlu0 %v498
  %v500 = vpop.xlane.xlu0 %499
  %v501 = vsel %vm235, %v468, 0.0
  %502 = vadd.xlane.f32.xlu0 %v501
  %v503 = vpop.xlane.xlu0 %502
  %v504 = vsel %vm235, %v469, 0.0
  %505 = vadd.xlane.f32.xlu0 %v504
  %v506 = vpop.xlane.xlu0 %505
  %v507 = vsel %vm441, %v470, 0.0
  %508 = vadd.xlane.f32.xlu0 %v507
  %v509 = vpop.xlane.xlu0 %508
  %v510 = vadd.f32 %v473, 0.0
  %v511 = vadd.f32 %v476, 0.0
  %v512 = vadd.f32 %v479, 0.0
  %v513 = vadd.f32 %v482, 0.0
  %v514 = vadd.f32 %v485, 0.0
  %v515 = vadd.f32 %v488, 0.0
  %v516 = vadd.f32 %v491, 0.0
  %v517 = vadd.f32 %v494, 0.0
  %v518 = vadd.f32 %v497, 0.0
  %v519 = vadd.f32 %v500, 0.0
  %v520 = vadd.f32 %v503, 0.0
  %v521 = vadd.f32 %v506, 0.0
  %v522 = vadd.f32 %v509, 0.0
  %s523 = scalar_lea.vmem %s6, 104
  %v524 = vld [vmem:[%s523] sm:$0xff]
  %v525 = vld [vmem:[%s523 + $0x8] sm:$0xff]
  %v526 = vld [vmem:[%s523 + $0x10] sm:$0xff]
  %v527 = vld [vmem:[%s523 + $0x18] sm:$0xff]
  %v528 = vld [vmem:[%s523 + $0x20] sm:$0xff]
  %v529 = vld [vmem:[%s523 + $0x28] sm:$0xff]
  %v530 = vld [vmem:[%s523 + $0x30] sm:$0xff]
  %v531 = vld [vmem:[%s523 + $0x38] sm:$0xff]
  %v532 = vld [vmem:[%s523 + $0x40] sm:$0xff]
  %v533 = vld [vmem:[%s523 + $0x48] sm:$0xff]
  %v534 = vld [vmem:[%s523 + $0x50] sm:$0xff]
  %v535 = vld [vmem:[%s523 + $0x58] sm:$0xff]
  %v536 = vld [vmem:[%s523 + $0x60] sm:$0xf]
  %v538 = vsel %vm59, %v524, 0
  %v541 = vsel %vm59, %v525, 0
  %v544 = vsel %vm59, %v526, 0
  %v547 = vsel %vm59, %v527, 0
  %v550 = vsel %vm59, %v528, 0
  %v553 = vsel %vm59, %v529, 0
  %v556 = vsel %vm59, %v530, 0
  %v559 = vsel %vm59, %v531, 0
  %v562 = vsel %vm59, %v532, 0
  %v565 = vsel %vm59, %v533, 0
  %v568 = vsel %vm59, %v534, 0
  %v571 = vsel %vm59, %v535, 0
  %v574 = vsel %vm59, %v536, 0
  %576 = vmatprep.subr.mxu0 0.0
  %577 = vmatpush1.msra.mxu0 %v26
  %578 = vmatprep.subr.mxu0 0.0
  %579 = vmatpush1.msra.mxu0 %v27
  %580 = vmatprep.subr.mxu0 0.0
  %581 = vmatpush1.msra.mxu0 %v28
  %582 = vmatprep.subr.mxu0 0.0
  %583 = vmatpush1.msra.mxu0 %v29
  %584 = vmatprep.subr.mxu0 0.0
  %585 = vmatpush1.msra.mxu0 0.0
  %586 = vmatprep.subr.mxu0 0.0
  %587 = vmatpush1.msra.mxu0 0.0
  %588 = vmatprep.subr.mxu0 0.0
  %589 = vmatpush1.msra.mxu0 0.0
  %590 = vmatprep.subr.mxu0 0.0
  %591 = vmatpush1.msra.mxu0 0.0
  %592 = vmatprep.subr.mxu0 0.0
  %593 = vmatpush1.msra.mxu0 0.0
  %594 = vmatprep.subr.mxu0 0.0
  %595 = vmatpush1.msra.mxu0 0.0
  %596 = vmatprep.subr.mxu0 0.0
  %597 = vmatpush1.msra.mxu0 0.0
  %598 = vmatprep.subr.mxu0 0.0
  %599 = vmatpush1.msra.mxu0 0.0
  %600 = vmatprep.subr.mxu0 0.0
  %601 = vmatpush1.msra.mxu0 0.0
  %602 = vmatprep.subr.mxu0 0.0
  %603 = vmatpush1.msra.mxu0 0.0
  %604 = vmatprep.subr.mxu0 0.0
  %605 = vmatpush1.msra.mxu0 0.0
  %606 = vmatprep.subr.mxu0 0.0
  %607 = vmatpush1.msra.mxu0 0.0
  %608 = vmatprep.subr.mxu0 0.0
  %609 = vmatpush1.msra.mxu0 0.0
  %610 = vmatprep.subr.mxu0 0.0
  %611 = vmatpush1.msra.mxu0 0.0
  %612 = vmatprep.subr.mxu0 0.0
  %613 = vmatpush1.msra.mxu0 0.0
  %614 = vmatprep.subr.mxu0 0.0
  %615 = vmatpush1.msra.mxu0 0.0
  %616 = vmatprep.subr.mxu0 0.0
  %617 = vmatpush1.msra.mxu0 0.0
  %618 = vmatprep.subr.mxu0 0.0
  %619 = vmatpush1.msra.mxu0 0.0
  %620 = vmatprep.subr.mxu0 0.0
  %621 = vmatpush1.msra.mxu0 0.0
  %622 = vmatprep.subr.mxu0 0.0
  %623 = vmatpush1.msra.mxu0 0.0
  %624 = vmatprep.subr.mxu0 0.0
  %625 = vmatpush1.msra.mxu0 0.0
  %626 = vmatprep.subr.mxu0 0.0
  %627 = vmatpush1.msra.mxu0 0.0
  %628 = vmatprep.subr.mxu0 0.0
  %629 = vmatpush1.msra.mxu0 0.0
  %630 = vmatprep.subr.mxu0 0.0
  %631 = vmatpush1.msra.mxu0 0.0
  %632 = vmatprep.subr.mxu0 0.0
  %633 = vmatpush1.msra.mxu0 0.0
  %634 = vmatprep.subr.mxu0 0.0
  %635 = vmatpush1.msra.mxu0 0.0
  %636 = vmatprep.subr.mxu0 0.0
  %637 = vmatpush1.msra.mxu0 0.0
  %638 = vmatprep.subr.mxu0 0.0
  %639 = vmatpush1.msra.mxu0 0.0
  %640 = vmatprep.mubr.f32.mxu0 0.0
  %641 = vmatmul.mubr.f32.gmra.mrb[0].mxu0 %v538
  %v642 = vpop.f32.mrb[0].mxu0
  %v643 = vadd.f32 %v57, %v642
  %v644 = vpop.f32.mrb[0].mxu0
  %645 = vmatprep.mubr.f32.mxu0 0.0
  %646 = vmatmul.mubr.f32.gmra.mrb[0].mxu0 %v541
  %v647 = vpop.f32.mrb[0].mxu0
  %v648 = vadd.f32 %v57, %v647
  %v649 = vpop.f32.mrb[0].mxu0
  %650 = vmatprep.mubr.f32.mxu0 0.0
  %651 = vmatmul.mubr.f32.gmra.mrb[0].mxu0 %v544
  %v652 = vpop.f32.mrb[0].mxu0
  %v653 = vadd.f32 %v57, %v652
  %v654 = vpop.f32.mrb[0].mxu0
  %655 = vmatprep.mubr.f32.mxu0 0.0
  %656 = vmatmul.mubr.f32.gmra.mrb[0].mxu0 %v547
  %v657 = vpop.f32.mrb[0].mxu0
  %v658 = vadd.f32 %v57, %v657
  %v659 = vpop.f32.mrb[0].mxu0
  %660 = vmatprep.mubr.f32.mxu0 0.0
  %661 = vmatmul.mubr.f32.gmra.mrb[0].mxu0 %v550
  %v662 = vpop.f32.mrb[0].mxu0
  %v663 = vadd.f32 %v57, %v662
  %v664 = vpop.f32.mrb[0].mxu0
  %665 = vmatprep.mubr.f32.mxu0 0.0
  %666 = vmatmul.mubr.f32.gmra.mrb[0].mxu0 %v553
  %v667 = vpop.f32.mrb[0].mxu0
  %v668 = vadd.f32 %v57, %v667
  %v669 = vpop.f32.mrb[0].mxu0
  %670 = vmatprep.mubr.f32.mxu0 0.0
  %671 = vmatmul.mubr.f32.gmra.mrb[0].mxu0 %v556
  %v672 = vpop.f32.mrb[0].mxu0
  %v673 = vadd.f32 %v57, %v672
  %v674 = vpop.f32.mrb[0].mxu0
  %675 = vmatprep.mubr.f32.mxu0 0.0
  %676 = vmatmul.mubr.f32.gmra.mrb[0].mxu0 %v559
  %v677 = vpop.f32.mrb[0].mxu0
  %v678 = vadd.f32 %v57, %v677
  %v679 = vpop.f32.mrb[0].mxu0
  %680 = vmatprep.mubr.f32.mxu0 0.0
  %681 = vmatmul.mubr.f32.gmra.mrb[0].mxu0 %v562
  %v682 = vpop.f32.mrb[0].mxu0
  %v683 = vadd.f32 %v57, %v682
  %v684 = vpop.f32.mrb[0].mxu0
  %685 = vmatprep.mubr.f32.mxu0 0.0
  %686 = vmatmul.mubr.f32.gmra.mrb[0].mxu0 %v565
  %v687 = vpop.f32.mrb[0].mxu0
  %v688 = vadd.f32 %v57, %v687
  %v689 = vpop.f32.mrb[0].mxu0
  %690 = vmatprep.mubr.f32.mxu0 0.0
  %691 = vmatmul.mubr.f32.gmra.mrb[0].mxu0 %v568
  %v692 = vpop.f32.mrb[0].mxu0
  %v693 = vadd.f32 %v57, %v692
  %v694 = vpop.f32.mrb[0].mxu0
  %695 = vmatprep.mubr.f32.mxu0 0.0
  %696 = vmatmul.mubr.f32.gmra.mrb[0].mxu0 %v571
  %v697 = vpop.f32.mrb[0].mxu0
  %v698 = vadd.f32 %v57, %v697
  %v699 = vpop.f32.mrb[0].mxu0
  %700 = vmatprep.mubr.f32.mxu0 0.0
  %701 = vmatmul.mubr.f32.gmra.mrb[0].mxu0 %v574
  %v702 = vpop.f32.mrb[0].mxu0
  %v703 = vadd.f32 %v57, %v702
  %v704 = vpop.f32.mrb[0].mxu0
  %705 = vdwg.mxu0
  %v707 = vsel %vm235, %v643, 0
  %v710 = vsel %vm235, %v648, 0
  %v713 = vsel %vm235, %v653, 0
  %v716 = vsel %vm235, %v658, 0
  %v719 = vsel %vm235, %v663, 0
  %v722 = vsel %vm235, %v668, 0
  %v725 = vsel %vm235, %v673, 0
  %v728 = vsel %vm235, %v678, 0
  %v731 = vsel %vm235, %v683, 0
  %v734 = vsel %vm235, %v688, 0
  %v737 = vsel %vm235, %v693, 0
  %v740 = vsel %vm235, %v698, 0
  %v743 = vsel %vm235, %v703, 0
  %745 = vmatprep.subr.mxu0 0.0
  %746 = vmatpush1.msra.mxu0 %v30
  %747 = vmatprep.subr.mxu0 0.0
  %748 = vmatpush1.msra.mxu0 %v31
  %749 = vmatprep.subr.mxu0 0.0
  %750 = vmatpush1.msra.mxu0 %v32
  %751 = vmatprep.subr.mxu0 0.0
  %752 = vmatpush1.msra.mxu0 %v33
  %753 = vmatprep.subr.mxu0 0.0
  %754 = vmatpush1.msra.mxu0 %v34
  %755 = vmatprep.subr.mxu0 0.0
  %756 = vmatpush1.msra.mxu0 %v35
  %757 = vmatprep.subr.mxu0 0.0
  %758 = vmatpush1.msra.mxu0 %v36
  %759 = vmatprep.subr.mxu0 0.0
  %760 = vmatpush1.msra.mxu0 %v37
  %761 = vmatprep.subr.mxu0 0.0
  %762 = vmatpush1.msra.mxu0 0.0
  %763 = vmatprep.subr.mxu0 0.0
  %764 = vmatpush1.msra.mxu0 0.0
  %765 = vmatprep.subr.mxu0 0.0
  %766 = vmatpush1.msra.mxu0 0.0
  %767 = vmatprep.subr.mxu0 0.0
  %768 = vmatpush1.msra.mxu0 0.0
  %769 = vmatprep.subr.mxu0 0.0
  %770 = vmatpush1.msra.mxu0 0.0
  %771 = vmatprep.subr.mxu0 0.0
  %772 = vmatpush1.msra.mxu0 0.0
  %773 = vmatprep.subr.mxu0 0.0
  %774 = vmatpush1.msra.mxu0 0.0
  %775 = vmatprep.subr.mxu0 0.0
  %776 = vmatpush1.msra.mxu0 0.0
  %777 = vmatprep.subr.mxu0 0.0
  %778 = vmatpush1.msra.mxu0 0.0
  %779 = vmatprep.subr.mxu0 0.0
  %780 = vmatpush1.msra.mxu0 0.0
  %781 = vmatprep.subr.mxu0 0.0
  %782 = vmatpush1.msra.mxu0 0.0
  %783 = vmatprep.subr.mxu0 0.0
  %784 = vmatpush1.msra.mxu0 0.0
  %785 = vmatprep.subr.mxu0 0.0
  %786 = vmatpush1.msra.mxu0 0.0
  %787 = vmatprep.subr.mxu0 0.0
  %788 = vmatpush1.msra.mxu0 0.0
  %789 = vmatprep.subr.mxu0 0.0
  %790 = vmatpush1.msra.mxu0 0.0
  %791 = vmatprep.subr.mxu0 0.0
  %792 = vmatpush1.msra.mxu0 0.0
  %793 = vmatprep.subr.mxu0 0.0
  %794 = vmatpush1.msra.mxu0 0.0
  %795 = vmatprep.subr.mxu0 0.0
  %796 = vmatpush1.msra.mxu0 0.0
  %797 = vmatprep.subr.mxu0 0.0
  %798 = vmatpush1.msra.mxu0 0.0
  %799 = vmatprep.subr.mxu0 0.0
  %800 = vmatpush1.msra.mxu0 0.0
  %801 = vmatprep.subr.mxu0 0.0
  %802 = vmatpush1.msra.mxu0 0.0
  %803 = vmatprep.subr.mxu0 0.0
  %804 = vmatpush1.msra.mxu0 0.0
  %805 = vmatprep.subr.mxu0 0.0
  %806 = vmatpush1.msra.mxu0 0.0
  %807 = vmatprep.subr.mxu0 0.0
  %808 = vmatpush1.msra.mxu0 0.0
  %809 = vmatprep.mubr.f32.mxu0 0.0
  %810 = vmatmul.mubr.f32.gmra.mrb[0].mxu0 %v707
  %v811 = vpop.f32.mrb[0].mxu0
  %v812 = vadd.f32 %v233, %v811
  %v813 = vpop.f32.mrb[0].mxu0
  %814 = vmatprep.mubr.f32.mxu0 0.0
  %815 = vmatmul.mubr.f32.gmra.mrb[0].mxu0 %v710
  %v816 = vpop.f32.mrb[0].mxu0
  %v817 = vadd.f32 %v233, %v816
  %v818 = vpop.f32.mrb[0].mxu0
  %819 = vmatprep.mubr.f32.mxu0 0.0
  %820 = vmatmul.mubr.f32.gmra.mrb[0].mxu0 %v713
  %v821 = vpop.f32.mrb[0].mxu0
  %v822 = vadd.f32 %v233, %v821
  %v823 = vpop.f32.mrb[0].mxu0
  %824 = vmatprep.mubr.f32.mxu0 0.0
  %825 = vmatmul.mubr.f32.gmra.mrb[0].mxu0 %v716
  %v826 = vpop.f32.mrb[0].mxu0
  %v827 = vadd.f32 %v233, %v826
  %v828 = vpop.f32.mrb[0].mxu0
  %829 = vmatprep.mubr.f32.mxu0 0.0
  %830 = vmatmul.mubr.f32.gmra.mrb[0].mxu0 %v719
  %v831 = vpop.f32.mrb[0].mxu0
  %v832 = vadd.f32 %v233, %v831
  %v833 = vpop.f32.mrb[0].mxu0
  %834 = vmatprep.mubr.f32.mxu0 0.0
  %835 = vmatmul.mubr.f32.gmra.mrb[0].mxu0 %v722
  %v836 = vpop.f32.mrb[0].mxu0
  %v837 = vadd.f32 %v233, %v836
  %v838 = vpop.f32.mrb[0].mxu0
  %839 = vmatprep.mubr.f32.mxu0 0.0
  %840 = vmatmul.mubr.f32.gmra.mrb[0].mxu0 %v725
  %v841 = vpop.f32.mrb[0].mxu0
  %v842 = vadd.f32 %v233, %v841
  %v843 = vpop.f32.mrb[0].mxu0
  %844 = vmatprep.mubr.f32.mxu0 0.0
  %845 = vmatmul.mubr.f32.gmra.mrb[0].mxu0 %v728
  %v846 = vpop.f32.mrb[0].mxu0
  %v847 = vadd.f32 %v233, %v846
  %v848 = vpop.f32.mrb[0].mxu0
  %849 = vmatprep.mubr.f32.mxu0 0.0
  %850 = vmatmul.mubr.f32.gmra.mrb[0].mxu0 %v731
  %v851 = vpop.f32.mrb[0].mxu0
  %v852 = vadd.f32 %v233, %v851
  %v853 = vpop.f32.mrb[0].mxu0
  %854 = vmatprep.mubr.f32.mxu0 0.0
  %855 = vmatmul.mubr.f32.gmra.mrb[0].mxu0 %v734
  %v856 = vpop.f32.mrb[0].mxu0
  %v857 = vadd.f32 %v233, %v856
  %v858 = vpop.f32.mrb[0].mxu0
  %859 = vmatprep.mubr.f32.mxu0 0.0
  %860 = vmatmul.mubr.f32.gmra.mrb[0].mxu0 %v737
  %v861 = vpop.f32.mrb[0].mxu0
  %v862 = vadd.f32 %v233, %v861
  %v863 = vpop.f32.mrb[0].mxu0
  %864 = vmatprep.mubr.f32.mxu0 0.0
  %865 = vmatmul.mubr.f32.gmra.mrb[0].mxu0 %v740
  %v866 = vpop.f32.mrb[0].mxu0
  %v867 = vadd.f32 %v233, %v866
  %v868 = vpop.f32.mrb[0].mxu0
  %869 = vmatprep.mubr.f32.mxu0 0.0
  %870 = vmatmul.mubr.f32.gmra.mrb[0].mxu0 %v743
  %v871 = vpop.f32.mrb[0].mxu0
  %v872 = vadd.f32 %v233, %v871
  %v873 = vpop.f32.mrb[0].mxu0
  %874 = vdwg.mxu0
  %v875 = vsel %vm235, %v812, 0.0
  %876 = vadd.xlane.f32.xlu0 %v875
  %v877 = vpop.xlane.xlu0 %876
  %v878 = vsel %vm235, %v817, 0.0
  %879 = vadd.xlane.f32.xlu0 %v878
  %v880 = vpop.xlane.xlu0 %879
  %v881 = vsel %vm235, %v822, 0.0
  %882 = vadd.xlane.f32.xlu0 %v881
  %v883 = vpop.xlane.xlu0 %882
  %v884 = vsel %vm235, %v827, 0.0
  %885 = vadd.xlane.f32.xlu0 %v884
  %v886 = vpop.xlane.xlu0 %885
  %v887 = vsel %vm235, %v832, 0.0
  %888 = vadd.xlane.f32.xlu0 %v887
  %v889 = vpop.xlane.xlu0 %888
  %v890 = vsel %vm235, %v837, 0.0
  %891 = vadd.xlane.f32.xlu0 %v890
  %v892 = vpop.xlane.xlu0 %891
  %v893 = vsel %vm235, %v842, 0.0
  %894 = vadd.xlane.f32.xlu0 %v893
  %v895 = vpop.xlane.xlu0 %894
  %v896 = vsel %vm235, %v847, 0.0
  %897 = vadd.xlane.f32.xlu0 %v896
  %v898 = vpop.xlane.xlu0 %897
  %v899 = vsel %vm235, %v852, 0.0
  %900 = vadd.xlane.f32.xlu0 %v899
  %v901 = vpop.xlane.xlu0 %900
  %v902 = vsel %vm235, %v857, 0.0
  %903 = vadd.xlane.f32.xlu0 %v902
  %v904 = vpop.xlane.xlu0 %903
  %v905 = vsel %vm235, %v862, 0.0
  %906 = vadd.xlane.f32.xlu0 %v905
  %v907 = vpop.xlane.xlu0 %906
  %v908 = vsel %vm235, %v867, 0.0
  %909 = vadd.xlane.f32.xlu0 %v908
  %v910 = vpop.xlane.xlu0 %909
  %v911 = vsel %vm441, %v872, 0.0
  %912 = vadd.xlane.f32.xlu0 %v911
  %v913 = vpop.xlane.xlu0 %912
  %v914 = vadd.f32 %v445, %v877
  %v915 = vadd.f32 %v446, %v880
  %v916 = vadd.f32 %v447, %v883
  %v917 = vadd.f32 %v448, %v886
  %v918 = vadd.f32 %v449, %v889
  %v919 = vadd.f32 %v450, %v892
  %v920 = vadd.f32 %v451, %v895
  %v921 = vadd.f32 %v452, %v898
  %v922 = vadd.f32 %v453, %v901
  %v923 = vadd.f32 %v454, %v904
  %v924 = vadd.f32 %v455, %v907
  %v925 = vadd.f32 %v456, %v910
  %v926 = vadd.f32 %v457, %v913
  %v927 = vmul.f32 %v812, %v812
  %v928 = vmul.f32 %v817, %v817
  %v929 = vmul.f32 %v822, %v822
  %v930 = vmul.f32 %v827, %v827
  %v931 = vmul.f32 %v832, %v832
  %v932 = vmul.f32 %v837, %v837
  %v933 = vmul.f32 %v842, %v842
  %v934 = vmul.f32 %v847, %v847
  %v935 = vmul.f32 %v852, %v852
  %v936 = vmul.f32 %v857, %v857
  %v937 = vmul.f32 %v862, %v862
  %v938 = vmul.f32 %v867, %v867
  %v939 = vmul.f32 %v872, %v872
  %v940 = vsel %vm235, %v927, 0.0
  %941 = vadd.xlane.f32.xlu0 %v940
  %v942 = vpop.xlane.xlu0 %941
  %v943 = vsel %vm235, %v928, 0.0
  %944 = vadd.xlane.f32.xlu0 %v943
  %v945 = vpop.xlane.xlu0 %944
  %v946 = vsel %vm235, %v929, 0.0
  %947 = vadd.xlane.f32.xlu0 %v946
  %v948 = vpop.xlane.xlu0 %947
  %v949 = vsel %vm235, %v930, 0.0
  %950 = vadd.xlane.f32.xlu0 %v949
  %v951 = vpop.xlane.xlu0 %950
  %v952 = vsel %vm235, %v931, 0.0
  %953 = vadd.xlane.f32.xlu0 %v952
  %v954 = vpop.xlane.xlu0 %953
  %v955 = vsel %vm235, %v932, 0.0
  %956 = vadd.xlane.f32.xlu0 %v955
  %v957 = vpop.xlane.xlu0 %956
  %v958 = vsel %vm235, %v933, 0.0
  %959 = vadd.xlane.f32.xlu0 %v958
  %v960 = vpop.xlane.xlu0 %959
  %v961 = vsel %vm235, %v934, 0.0
  %962 = vadd.xlane.f32.xlu0 %v961
  %v963 = vpop.xlane.xlu0 %962
  %v964 = vsel %vm235, %v935, 0.0
  %965 = vadd.xlane.f32.xlu0 %v964
  %v966 = vpop.xlane.xlu0 %965
  %v967 = vsel %vm235, %v936, 0.0
  %968 = vadd.xlane.f32.xlu0 %v967
  %v969 = vpop.xlane.xlu0 %968
  %v970 = vsel %vm235, %v937, 0.0
  %971 = vadd.xlane.f32.xlu0 %v970
  %v972 = vpop.xlane.xlu0 %971
  %v973 = vsel %vm235, %v938, 0.0
  %974 = vadd.xlane.f32.xlu0 %v973
  %v975 = vpop.xlane.xlu0 %974
  %v976 = vsel %vm441, %v939, 0.0
  %977 = vadd.xlane.f32.xlu0 %v976
  %v978 = vpop.xlane.xlu0 %977
  %v979 = vadd.f32 %v510, %v942
  %v980 = vadd.f32 %v511, %v945
  %v981 = vadd.f32 %v512, %v948
  %v982 = vadd.f32 %v513, %v951
  %v983 = vadd.f32 %v514, %v954
  %v984 = vadd.f32 %v515, %v957
  %v985 = vadd.f32 %v516, %v960
  %v986 = vadd.f32 %v517, %v963
  %v987 = vadd.f32 %v518, %v966
  %v988 = vadd.f32 %v519, %v969
  %v989 = vadd.f32 %v520, %v972
  %v990 = vadd.f32 %v521, %v975
  %v991 = vadd.f32 %v522, %v978
  %v992 = vmul.f32 %v914, 0.0078125
  %v993 = vmul.f32 %v915, 0.0078125
  %v994 = vmul.f32 %v916, 0.0078125
  %v995 = vmul.f32 %v917, 0.0078125
  %v996 = vmul.f32 %v918, 0.0078125
  %v997 = vmul.f32 %v919, 0.0078125
  %v998 = vmul.f32 %v920, 0.0078125
  %v999 = vmul.f32 %v921, 0.0078125
  %v1000 = vmul.f32 %v922, 0.0078125
  %v1001 = vmul.f32 %v923, 0.0078125
  %v1002 = vmul.f32 %v924, 0.0078125
  %v1003 = vmul.f32 %v925, 0.0078125
  %v1004 = vmul.f32 %v926, 0.0078125
  %v1005 = vmul.f32 %v979, 0.0078125
  %v1006 = vmul.f32 %v980, 0.0078125
  %v1007 = vmul.f32 %v981, 0.0078125
  %v1008 = vmul.f32 %v982, 0.0078125
  %v1009 = vmul.f32 %v983, 0.0078125
  %v1010 = vmul.f32 %v984, 0.0078125
  %v1011 = vmul.f32 %v985, 0.0078125
  %v1012 = vmul.f32 %v986, 0.0078125
  %v1013 = vmul.f32 %v987, 0.0078125
  %v1014 = vmul.f32 %v988, 0.0078125
  %v1015 = vmul.f32 %v989, 0.0078125
  %v1016 = vmul.f32 %v990, 0.0078125
  %v1017 = vmul.f32 %v991, 0.0078125
  %v1018 = vmul.f32 %v992, %v992
  %v1019 = vmul.f32 %v993, %v993
  %v1020 = vmul.f32 %v994, %v994
  %v1021 = vmul.f32 %v995, %v995
  %v1022 = vmul.f32 %v996, %v996
  %v1023 = vmul.f32 %v997, %v997
  %v1024 = vmul.f32 %v998, %v998
  %v1025 = vmul.f32 %v999, %v999
  %v1026 = vmul.f32 %v1000, %v1000
  %v1027 = vmul.f32 %v1001, %v1001
  %v1028 = vmul.f32 %v1002, %v1002
  %v1029 = vmul.f32 %v1003, %v1003
  %v1030 = vmul.f32 %v1004, %v1004
  %v1031 = vsub.f32 %v1005, %v1018
  %v1032 = vsub.f32 %v1006, %v1019
  %v1033 = vsub.f32 %v1007, %v1020
  %v1034 = vsub.f32 %v1008, %v1021
  %v1035 = vsub.f32 %v1009, %v1022
  %v1036 = vsub.f32 %v1010, %v1023
  %v1037 = vsub.f32 %v1011, %v1024
  %v1038 = vsub.f32 %v1012, %v1025
  %v1039 = vsub.f32 %v1013, %v1026
  %v1040 = vsub.f32 %v1014, %v1027
  %v1041 = vsub.f32 %v1015, %v1028
  %v1042 = vsub.f32 %v1016, %v1029
  %v1043 = vsub.f32 %v1017, %v1030
  %v1044 = vadd.f32 %v1031, 1e-05
  %v1045 = vadd.f32 %v1032, 1e-05
  %v1046 = vadd.f32 %v1033, 1e-05
  %v1047 = vadd.f32 %v1034, 1e-05
  %v1048 = vadd.f32 %v1035, 1e-05
  %v1049 = vadd.f32 %v1036, 1e-05
  %v1050 = vadd.f32 %v1037, 1e-05
  %v1051 = vadd.f32 %v1038, 1e-05
  %v1052 = vadd.f32 %v1039, 1e-05
  %v1053 = vadd.f32 %v1040, 1e-05
  %v1054 = vadd.f32 %v1041, 1e-05
  %v1055 = vadd.f32 %v1042, 1e-05
  %v1056 = vadd.f32 %v1043, 1e-05
  %v1057 = vrsqrt.pop %v1044
  %v1058 = vrsqrt.pop %v1045
  %v1059 = vrsqrt.pop %v1046
  %v1060 = vrsqrt.pop %v1047
  %v1061 = vrsqrt.pop %v1048
  %v1062 = vrsqrt.pop %v1049
  %v1063 = vrsqrt.pop %v1050
  %v1064 = vrsqrt.pop %v1051
  %v1065 = vrsqrt.pop %v1052
  %v1066 = vrsqrt.pop %v1053
  %v1067 = vrsqrt.pop %v1054
  %v1068 = vrsqrt.pop %v1055
  %v1069 = vrsqrt.pop %v1056
  %v1070 = vld [vmem:[%s4] sm:$0xff]
  %v1071 = vld [vmem:[%s4 + $0x8] sm:$0xff]
  %v1072 = vld [vmem:[%s4 + $0x10] sm:$0xff]
  %v1073 = vld [vmem:[%s4 + $0x18] sm:$0xff]
  %v1074 = vld [vmem:[%s4 + $0x20] sm:$0xff]
  %v1075 = vld [vmem:[%s4 + $0x28] sm:$0xff]
  %v1076 = vld [vmem:[%s4 + $0x30] sm:$0xff]
  %v1077 = vld [vmem:[%s4 + $0x38] sm:$0xff]
  %v1078 = vld [vmem:[%s4 + $0x40] sm:$0xff]
  %v1079 = vld [vmem:[%s4 + $0x48] sm:$0xff]
  %v1080 = vld [vmem:[%s4 + $0x50] sm:$0xff]
  %v1081 = vld [vmem:[%s4 + $0x58] sm:$0xff]
  %v1082 = vld [vmem:[%s4 + $0x60] sm:$0xf]
  %v1083 = vmul.f32 %v1057, %v1070
  %v1084 = vmul.f32 %v1058, %v1071
  %v1085 = vmul.f32 %v1059, %v1072
  %v1086 = vmul.f32 %v1060, %v1073
  %v1087 = vmul.f32 %v1061, %v1074
  %v1088 = vmul.f32 %v1062, %v1075
  %v1089 = vmul.f32 %v1063, %v1076
  %v1090 = vmul.f32 %v1064, %v1077
  %v1091 = vmul.f32 %v1065, %v1078
  %v1092 = vmul.f32 %v1066, %v1079
  %v1093 = vmul.f32 %v1067, %v1080
  %v1094 = vmul.f32 %v1068, %v1081
  %v1095 = vmul.f32 %v1069, %v1082
  %v1096 = vld [vmem:[%s5] sm:$0xff]
  %v1097 = vld [vmem:[%s5 + $0x8] sm:$0xff]
  %v1098 = vld [vmem:[%s5 + $0x10] sm:$0xff]
  %v1099 = vld [vmem:[%s5 + $0x18] sm:$0xff]
  %v1100 = vld [vmem:[%s5 + $0x20] sm:$0xff]
  %v1101 = vld [vmem:[%s5 + $0x28] sm:$0xff]
  %v1102 = vld [vmem:[%s5 + $0x30] sm:$0xff]
  %v1103 = vld [vmem:[%s5 + $0x38] sm:$0xff]
  %v1104 = vld [vmem:[%s5 + $0x40] sm:$0xff]
  %v1105 = vld [vmem:[%s5 + $0x48] sm:$0xff]
  %v1106 = vld [vmem:[%s5 + $0x50] sm:$0xff]
  %v1107 = vld [vmem:[%s5 + $0x58] sm:$0xff]
  %v1108 = vld [vmem:[%s5 + $0x60] sm:$0xf]
  %v1109 = vmul.f32 %v992, %v1083
  %v1110 = vmul.f32 %v993, %v1084
  %v1111 = vmul.f32 %v994, %v1085
  %v1112 = vmul.f32 %v995, %v1086
  %v1113 = vmul.f32 %v996, %v1087
  %v1114 = vmul.f32 %v997, %v1088
  %v1115 = vmul.f32 %v998, %v1089
  %v1116 = vmul.f32 %v999, %v1090
  %v1117 = vmul.f32 %v1000, %v1091
  %v1118 = vmul.f32 %v1001, %v1092
  %v1119 = vmul.f32 %v1002, %v1093
  %v1120 = vmul.f32 %v1003, %v1094
  %v1121 = vmul.f32 %v1004, %v1095
  %v1122 = vsub.f32 %v1096, %v1109
  %v1123 = vsub.f32 %v1097, %v1110
  %v1124 = vsub.f32 %v1098, %v1111
  %v1125 = vsub.f32 %v1099, %v1112
  %v1126 = vsub.f32 %v1100, %v1113
  %v1127 = vsub.f32 %v1101, %v1114
  %v1128 = vsub.f32 %v1102, %v1115
  %v1129 = vsub.f32 %v1103, %v1116
  %v1130 = vsub.f32 %v1104, %v1117
  %v1131 = vsub.f32 %v1105, %v1118
  %v1132 = vsub.f32 %v1106, %v1119
  %v1133 = vsub.f32 %v1107, %v1120
  %v1134 = vsub.f32 %v1108, %v1121
  %1136 = vset.pattern.permute.xlu0 0
  %1137 = vperm.xlu0 %1136, %v1083
  %v1138 = vpop.permute.xlu0 %1137
  %1141 = vset.pattern.permute.xlu0 0
  %1142 = vperm.xlu0 %1141, %v1084
  %v1143 = vpop.permute.xlu0 %1142
  %1146 = vset.pattern.permute.xlu0 0
  %1147 = vperm.xlu0 %1146, %v1085
  %v1148 = vpop.permute.xlu0 %1147
  %1151 = vset.pattern.permute.xlu0 0
  %1152 = vperm.xlu0 %1151, %v1086
  %v1153 = vpop.permute.xlu0 %1152
  %1156 = vset.pattern.permute.xlu0 0
  %1157 = vperm.xlu0 %1156, %v1087
  %v1158 = vpop.permute.xlu0 %1157
  %1161 = vset.pattern.permute.xlu0 0
  %1162 = vperm.xlu0 %1161, %v1088
  %v1163 = vpop.permute.xlu0 %1162
  %1166 = vset.pattern.permute.xlu0 0
  %1167 = vperm.xlu0 %1166, %v1089
  %v1168 = vpop.permute.xlu0 %1167
  %1171 = vset.pattern.permute.xlu0 0
  %1172 = vperm.xlu0 %1171, %v1090
  %v1173 = vpop.permute.xlu0 %1172
  %1176 = vset.pattern.permute.xlu0 0
  %1177 = vperm.xlu0 %1176, %v1091
  %v1178 = vpop.permute.xlu0 %1177
  %1181 = vset.pattern.permute.xlu0 0
  %1182 = vperm.xlu0 %1181, %v1092
  %v1183 = vpop.permute.xlu0 %1182
  %1186 = vset.pattern.permute.xlu0 0
  %1187 = vperm.xlu0 %1186, %v1093
  %v1188 = vpop.permute.xlu0 %1187
  %1191 = vset.pattern.permute.xlu0 0
  %1192 = vperm.xlu0 %1191, %v1094
  %v1193 = vpop.permute.xlu0 %1192
  %1196 = vset.pattern.permute.xlu0 0
  %1197 = vperm.xlu0 %1196, %v1095
  %v1198 = vpop.permute.xlu0 %1197
  %v1200 = vmul.f32 %v342, %v1138
  %v1201 = vmul.f32 %v347, %v1143
  %v1202 = vmul.f32 %v352, %v1148
  %v1203 = vmul.f32 %v357, %v1153
  %v1204 = vmul.f32 %v362, %v1158
  %v1205 = vmul.f32 %v367, %v1163
  %v1206 = vmul.f32 %v372, %v1168
  %v1207 = vmul.f32 %v377, %v1173
  %v1208 = vmul.f32 %v382, %v1178
  %v1209 = vmul.f32 %v387, %v1183
  %v1210 = vmul.f32 %v392, %v1188
  %v1211 = vmul.f32 %v397, %v1193
  %v1212 = vmul.f32 %v402, %v1198
  %1214 = vset.pattern.permute.xlu0 0
  %1215 = vperm.xlu0 %1214, %v1122
  %v1216 = vpop.permute.xlu0 %1215
  %1219 = vset.pattern.permute.xlu0 0
  %1220 = vperm.xlu0 %1219, %v1123
  %v1221 = vpop.permute.xlu0 %1220
  %1224 = vset.pattern.permute.xlu0 0
  %1225 = vperm.xlu0 %1224, %v1124
  %v1226 = vpop.permute.xlu0 %1225
  %1229 = vset.pattern.permute.xlu0 0
  %1230 = vperm.xlu0 %1229, %v1125
  %v1231 = vpop.permute.xlu0 %1230
  %1234 = vset.pattern.permute.xlu0 0
  %1235 = vperm.xlu0 %1234, %v1126
  %v1236 = vpop.permute.xlu0 %1235
  %1239 = vset.pattern.permute.xlu0 0
  %1240 = vperm.xlu0 %1239, %v1127
  %v1241 = vpop.permute.xlu0 %1240
  %1244 = vset.pattern.permute.xlu0 0
  %1245 = vperm.xlu0 %1244, %v1128
  %v1246 = vpop.permute.xlu0 %1245
  %1249 = vset.pattern.permute.xlu0 0
  %1250 = vperm.xlu0 %1249, %v1129
  %v1251 = vpop.permute.xlu0 %1250
  %1254 = vset.pattern.permute.xlu0 0
  %1255 = vperm.xlu0 %1254, %v1130
  %v1256 = vpop.permute.xlu0 %1255
  %1259 = vset.pattern.permute.xlu0 0
  %1260 = vperm.xlu0 %1259, %v1131
  %v1261 = vpop.permute.xlu0 %1260
  %1264 = vset.pattern.permute.xlu0 0
  %1265 = vperm.xlu0 %1264, %v1132
  %v1266 = vpop.permute.xlu0 %1265
  %1269 = vset.pattern.permute.xlu0 0
  %1270 = vperm.xlu0 %1269, %v1133
  %v1271 = vpop.permute.xlu0 %1270
  %1274 = vset.pattern.permute.xlu0 0
  %1275 = vperm.xlu0 %1274, %v1134
  %v1276 = vpop.permute.xlu0 %1275
  %v1278 = vadd.f32 %v1200, %v1216
  %v1279 = vadd.f32 %v1201, %v1221
  %v1280 = vadd.f32 %v1202, %v1226
  %v1281 = vadd.f32 %v1203, %v1231
  %v1282 = vadd.f32 %v1204, %v1236
  %v1283 = vadd.f32 %v1205, %v1241
  %v1284 = vadd.f32 %v1206, %v1246
  %v1285 = vadd.f32 %v1207, %v1251
  %v1286 = vadd.f32 %v1208, %v1256
  %v1287 = vadd.f32 %v1209, %v1261
  %v1288 = vadd.f32 %v1210, %v1266
  %v1289 = vadd.f32 %v1211, %v1271
  %v1290 = vadd.f32 %v1212, %v1276
  %v1291 = vmax.f32 %v1278, 0.0
  %v1292 = vmax.f32 %v1279, 0.0
  %v1293 = vmax.f32 %v1280, 0.0
  %v1294 = vmax.f32 %v1281, 0.0
  %v1295 = vmax.f32 %v1282, 0.0
  %v1296 = vmax.f32 %v1283, 0.0
  %v1297 = vmax.f32 %v1284, 0.0
  %v1298 = vmax.f32 %v1285, 0.0
  %v1299 = vmax.f32 %v1286, 0.0
  %v1300 = vmax.f32 %v1287, 0.0
  %v1301 = vmax.f32 %v1288, 0.0
  %v1302 = vmax.f32 %v1289, 0.0
  %v1303 = vmax.f32 %v1290, 0.0
  %1304 = vst.msk [vmem:[%s7] sm:$0xff] %vm235, %v1291
  %1305 = vst.msk [vmem:[%s7 + $0x8] sm:$0xff] %vm235, %v1292
  %1306 = vst.msk [vmem:[%s7 + $0x10] sm:$0xff] %vm235, %v1293
  %1307 = vst.msk [vmem:[%s7 + $0x18] sm:$0xff] %vm235, %v1294
  %1308 = vst.msk [vmem:[%s7 + $0x20] sm:$0xff] %vm235, %v1295
  %1309 = vst.msk [vmem:[%s7 + $0x28] sm:$0xff] %vm235, %v1296
  %1310 = vst.msk [vmem:[%s7 + $0x30] sm:$0xff] %vm235, %v1297
  %1311 = vst.msk [vmem:[%s7 + $0x38] sm:$0xff] %vm235, %v1298
  %1312 = vst.msk [vmem:[%s7 + $0x40] sm:$0xff] %vm235, %v1299
  %1313 = vst.msk [vmem:[%s7 + $0x48] sm:$0xff] %vm235, %v1300
  %1314 = vst.msk [vmem:[%s7 + $0x50] sm:$0xff] %vm235, %v1301
  %1315 = vst.msk [vmem:[%s7 + $0x58] sm:$0xff] %vm235, %v1302
  %1316 = vst.msk [vmem:[%s7 + $0x60] sm:$0xf] %vm441, %v1303
  %v1317 = vmul.f32 %v812, %v1138
  %v1318 = vmul.f32 %v817, %v1143
  %v1319 = vmul.f32 %v822, %v1148
  %v1320 = vmul.f32 %v827, %v1153
  %v1321 = vmul.f32 %v832, %v1158
  %v1322 = vmul.f32 %v837, %v1163
  %v1323 = vmul.f32 %v842, %v1168
  %v1324 = vmul.f32 %v847, %v1173
  %v1325 = vmul.f32 %v852, %v1178
  %v1326 = vmul.f32 %v857, %v1183
  %v1327 = vmul.f32 %v862, %v1188
  %v1328 = vmul.f32 %v867, %v1193
  %v1329 = vmul.f32 %v872, %v1198
  %v1330 = vadd.f32 %v1317, %v1216
  %v1331 = vadd.f32 %v1318, %v1221
  %v1332 = vadd.f32 %v1319, %v1226
  %v1333 = vadd.f32 %v1320, %v1231
  %v1334 = vadd.f32 %v1321, %v1236
  %v1335 = vadd.f32 %v1322, %v1241
  %v1336 = vadd.f32 %v1323, %v1246
  %v1337 = vadd.f32 %v1324, %v1251
  %v1338 = vadd.f32 %v1325, %v1256
  %v1339 = vadd.f32 %v1326, %v1261
  %v1340 = vadd.f32 %v1327, %v1266
  %v1341 = vadd.f32 %v1328, %v1271
  %v1342 = vadd.f32 %v1329, %v1276
  %v1343 = vmax.f32 %v1330, 0.0
  %v1344 = vmax.f32 %v1331, 0.0
  %v1345 = vmax.f32 %v1332, 0.0
  %v1346 = vmax.f32 %v1333, 0.0
  %v1347 = vmax.f32 %v1334, 0.0
  %v1348 = vmax.f32 %v1335, 0.0
  %v1349 = vmax.f32 %v1336, 0.0
  %v1350 = vmax.f32 %v1337, 0.0
  %v1351 = vmax.f32 %v1338, 0.0
  %v1352 = vmax.f32 %v1339, 0.0
  %v1353 = vmax.f32 %v1340, 0.0
  %v1354 = vmax.f32 %v1341, 0.0
  %v1355 = vmax.f32 %v1342, 0.0
  %s1356 = scalar_lea.vmem %s7, 104
  %1357 = vst.msk [vmem:[%s1356] sm:$0xff] %vm235, %v1343
  %1358 = vst.msk [vmem:[%s1356 + $0x8] sm:$0xff] %vm235, %v1344
  %1359 = vst.msk [vmem:[%s1356 + $0x10] sm:$0xff] %vm235, %v1345
  %1360 = vst.msk [vmem:[%s1356 + $0x18] sm:$0xff] %vm235, %v1346
  %1361 = vst.msk [vmem:[%s1356 + $0x20] sm:$0xff] %vm235, %v1347
  %1362 = vst.msk [vmem:[%s1356 + $0x28] sm:$0xff] %vm235, %v1348
  %1363 = vst.msk [vmem:[%s1356 + $0x30] sm:$0xff] %vm235, %v1349
  %1364 = vst.msk [vmem:[%s1356 + $0x38] sm:$0xff] %vm235, %v1350
  %1365 = vst.msk [vmem:[%s1356 + $0x40] sm:$0xff] %vm235, %v1351
  %1366 = vst.msk [vmem:[%s1356 + $0x48] sm:$0xff] %vm235, %v1352
  %1367 = vst.msk [vmem:[%s1356 + $0x50] sm:$0xff] %vm235, %v1353
  %1368 = vst.msk [vmem:[%s1356 + $0x58] sm:$0xff] %vm235, %v1354
  %1369 = vst.msk [vmem:[%s1356 + $0x60] sm:$0xf] %vm441, %v1355
  // Predicated region
  $region30: #{tpu_custom_call.1} parent=0 // pred_check
    _
  $region31: #{tpu_custom_call.1} parent=0 // pred_check_branch
    %1371 = sbr.rel (0) target = $region33
  $region32: #{tpu_custom_call.1} parent=0 // pred_region
    _
  $region33: #{tpu_custom_call.1} parent=0 // pred_fallthru
    _
  // Predicated region
  $region34: #{tpu_custom_call.1} parent=0 // pred_check
    _
  $region35: #{tpu_custom_call.1} parent=0 // pred_check_branch
    %1373 = sbr.rel (0) target = $region37
  $region36: #{tpu_custom_call.1} parent=0 // pred_region
    _
  $region37: #{tpu_custom_call.1} parent=0 // pred_fallthru
    _

</llo_original>
